<compile_context>
chip_gen: v6e
topology: v6e:2x2x1
jax: 0.10.0
libtpu: 0.0.40
codegen_flags: <defaults>
</compile_context>

<pallas_src>
import functools
import math

import jax
import jax.numpy as jnp
from jax.experimental import pallas as pl
from jax.experimental.pallas import tpu as pltpu


# --------------------------------- kernel -----------------------------------


def _score_kernel(hr_ref, et_ref, out_ref, *, bf16_epilogue):
    """out[b, e] = sigmoid( sum_d hr[b, d] * Et[d, e] ), stored in bf16.

    hr_ref : (tile_b, D)        bf16  (resident across the NE axis)
    et_ref : (D, tile_ne)       bf16  (lane-dense, streamed from HBM)
    out_ref: (tile_b, tile_ne)  bf16
    """
    s = jax.lax.dot_general(
        hr_ref[...], et_ref[...],
        dimension_numbers=(((1,), (0,)), ((), ())),   # NN matmul, no transpose
        preferred_element_type=jnp.float32,           # f32 MXU accumulation
    )
    if bf16_epilogue:
        # v6e/v7x: bf16 EUP runs at 2x element rate -> keeps the kernel DMA-bound.
        out_ref[...] = jax.nn.sigmoid(s.astype(jnp.bfloat16))
    else:
        # v5e (no bf16 EUP/VPU): sigmoid in f32, cast only for the store.
        out_ref[...] = jax.nn.sigmoid(s).astype(jnp.bfloat16)


# ----------------------------- tiling helpers --------------------------------


def _round_up(x, m):
    return (x + m - 1) // m * m


def _detect_chip():
    """Best-effort TPU generation detection from the device kind string."""
    try:
        kind = jax.devices()[0].device_kind.lower()
    except Exception:  # pragma: no cover - defensive
        kind = ""
    if "v7" in kind:
        return "v7x"
    if "v6" in kind:
        return "v6e"
    if "v5" in kind and ("lite" in kind or "v5e" in kind or "5e" in kind):
        return "v5e"
    return "other"


def _chip_config(chip):
    """(vmem_limit_bytes, tile_vmem_budget, ne_tile_cap, bf16_epilogue, two_core)."""
    if chip == "v7x":
        # 64 MiB physical VMEM, 2 TensorCores, bf16 EUP.
        return 40 * 1024 * 1024, 20 * 1024 * 1024, 4096, True, True
    if chip == "v6e":
        # 128 MiB physical VMEM, 1 TensorCore, bf16 EUP.
        return 80 * 1024 * 1024, 48 * 1024 * 1024, 8192, True, False
    if chip == "v5e":
        # 128 MiB physical VMEM, 1 TensorCore, NO bf16 EUP/VPU.
        return 80 * 1024 * 1024, 48 * 1024 * 1024, 8192, False, False
    # Unknown chip: conservative VMEM sizing, conservative f32 epilogue.
    return 40 * 1024 * 1024, 20 * 1024 * 1024, 4096, False, False


def _choose_tiles(num_entities, entity_dim, batch, chip):
    """Pick (tile_b, b_pad, tile_ne, ne_pad) for this chip generation."""
    _, tile_budget, ne_cap, _, two_core = _chip_config(chip)

    # Batch tiling: minimum 16 (bf16 (16,128) packed layout); take the largest
    # candidate whose round-up waste stays <= ~12.5% of the batch.
    b = max(batch, 1)
    tile_b = 16
    b_pad = _round_up(b, 16)
    for cand in (32, 64, 128, 256):
        pad = _round_up(b, cand)
        if pad - b <= max(b // 8, 0):
            tile_b = cand
            b_pad = pad

    ne_min = _round_up(num_entities, 128)
    # bytes per NE column: double-buffered bf16 Et column + double-buffered
    # bf16 output column (output is bf16 now).
    per_col = 2 * (entity_dim * 2) + 2 * (tile_b * 2)
    tile_ne = tile_budget // per_col
    tile_ne = min(tile_ne, ne_cap, ne_min)
    # Keep >= 2 NE grid steps only where it feeds two TensorCores (v7x) and
    # the batch axis doesn't already provide parallel grid steps.
    if two_core and ne_min >= 256 and (b_pad // tile_b) < 2:
        tile_ne = min(tile_ne, ne_min // 2)
    tile_ne = max(128, (tile_ne // 128) * 128)
    ne_pad = _round_up(num_entities, tile_ne)
    return tile_b, b_pad, tile_ne, ne_pad


def prepare_entity_table(E, ne_pad):
    """One-time (amortized) prep: pad + transpose + bf16-cast the entity table.

    Returns Et of shape (D, ne_pad) so the kernel streams lane-dense bf16 tiles
    and performs a plain NN matmul (no in-kernel transpose).
    """
    # TODO(synk): optional fp8 (v7x) / int8 (v5e/v6e) quantization of Et with a
    # per-column scale would halve the dominant HBM stream again; needs score
    # accuracy validation, so the bf16 path is kept here.
    ne, d = E.shape
    Et = jnp.zeros((d, ne_pad), jnp.bfloat16)
    return Et.at[:, :ne].set(E.T.astype(jnp.bfloat16))


# --------------------------------- forward ----------------------------------


def embedding_model_forward(e1_idx, r_idx, E, R, Et, *, tile_b, b_pad, tile_ne,
                            chip):
    """pred_padded = sigmoid((E[e1_idx] * R[r_idx]) @ E.T)   (DistMult 1-N score).

    Returns the PADDED (b_pad, ne_pad) bf16 array; padded rows/columns contain
    sigmoid(0) = 0.5 and must be ignored (indexed/masked) by the consumer.
    Keeping the slice out of the hot path avoids an extra full read+write pass
    over the (B, NE) output in HBM.

    TODO(synk): calculate_score is abstract in the reference module; DistMult
    is used here as the concrete score function.
    """
    num_entities, entity_dim = E.shape
    ne_pad = Et.shape[1]
    assert Et.shape[0] == entity_dim and ne_pad % tile_ne == 0

    vmem_limit, _, _, bf16_epilogue, _ = _chip_config(chip)

    # Glue (plain JAX): embedding gathers + the one-time elementwise product.
    # TODO(synk): for small-NE / latency-sensitive calls these gathers could be
    # fused into the kernel via scalar-prefetched indices; negligible here.
    h = jnp.take(E, e1_idx, axis=0)                 # (B, D) f32
    r = jnp.take(R, r_idx, axis=0)                  # (B, D) f32
    hr = (h * r).astype(jnp.bfloat16)               # f32 multiply, bf16 at the dot
    batch = hr.shape[0]
    if b_pad != batch:
        hr = jnp.zeros((b_pad, entity_dim), jnp.bfloat16).at[:batch].set(hr)

    # NE axis outer, batch axis inner: the Et tile stays resident while the
    # inner batch loop runs, amortizing the entity-table HBM stream over B.
    grid = (ne_pad // tile_ne, b_pad // tile_b)

    out = pl.pallas_call(
        functools.partial(_score_kernel, bf16_epilogue=bf16_epilogue),
        out_shape=jax.ShapeDtypeStruct((b_pad, ne_pad), jnp.bfloat16),
        grid_spec=pltpu.PrefetchScalarGridSpec(
            num_scalar_prefetch=0,
            grid=grid,
            in_specs=[
                pl.BlockSpec((tile_b, entity_dim), lambda j, i: (i, 0)),   # hr
                pl.BlockSpec((entity_dim, tile_ne), lambda j, i: (0, j)),  # Et
            ],
            out_specs=pl.BlockSpec((tile_b, tile_ne), lambda j, i: (i, j)),
        ),
        compiler_params=pltpu.CompilerParams(
            dimension_semantics=("parallel", "parallel"),
            vmem_limit_bytes=vmem_limit,
        ),
    )(hr, Et)
    return out   # padded (b_pad, ne_pad) bf16; consumer masks/slices lazily


# ----------------------------------- demo -----------------------------------


def _xavier_normal(key, shape):
    fan_out, fan_in = shape  # nn.Embedding weight: (num_embeddings, dim)
    std = math.sqrt(2.0 / (fan_in + fan_out))
    return std * jax.random.normal(key, shape, dtype=jnp.float32)


if __name__ == "__main__":
    key = jax.random.PRNGKey(0)
    k_e, k_r, k_e1, k_ri = jax.random.split(key, 4)

    # Small, module-consistent shapes (NE deliberately not a multiple of 128
    # to exercise the padding path).
    num_entities = 1000
    num_relations = 64
    entity_dim = 64
    batch = 8

    # Deterministic parameter init (xavier_normal_), padding_idx=0 row zeroed.
    E = _xavier_normal(k_e, (num_entities, entity_dim))
    E = E.at[0].set(0.0)
    R = _xavier_normal(k_r, (num_relations, entity_dim))
    R = R.at[0].set(0.0)

    e1_idx = jax.random.randint(k_e1, (batch,), 0, num_entities, dtype=jnp.int32)
    r_idx = jax.random.randint(k_ri, (batch,), 0, num_relations, dtype=jnp.int32)

    chip = _detect_chip()
    tile_b, b_pad, tile_ne, ne_pad = _choose_tiles(
        num_entities, entity_dim, batch, chip)
    Et = prepare_entity_table(E, ne_pad)   # once, outside the per-call hot path

    pred_padded = embedding_model_forward(
        e1_idx, r_idx, E, R, Et,
        tile_b=tile_b, b_pad=b_pad, tile_ne=tile_ne, chip=chip)
    pred_padded = jax.block_until_ready(pred_padded)
    assert pred_padded.shape == (b_pad, ne_pad)
    assert pred_padded.dtype == jnp.bfloat16

    # Slice once (outside the hot path) for the correctness check.
    pred = jnp.asarray(pred_padded[:batch, :num_entities], dtype=jnp.float32)
    assert pred.shape == (batch, num_entities)

    # Reference with the same bf16 streaming precision (should match tightly).
    h = jnp.take(E, e1_idx, axis=0)
    r = jnp.take(R, r_idx, axis=0)
    hr_bf16 = (h * r).astype(jnp.bfloat16)
    s_ref = jnp.dot(hr_bf16, E.T.astype(jnp.bfloat16),
                    preferred_element_type=jnp.float32)
    ref_bf16 = jax.nn.sigmoid(s_ref).astype(jnp.bfloat16).astype(jnp.float32)
    assert jnp.allclose(pred, ref_bf16, atol=1.5e-2), "mismatch vs bf16 reference"

    # Loose sanity check against the full-f32 reference (bf16 drift allowed).
    ref_f32 = jax.nn.sigmoid((h * r) @ E.T)
    assert jnp.allclose(pred, ref_f32, atol=2.5e-2), "mismatch vs f32 reference"

    print("KERNEL_OK")
</pallas_src>

<mosaic_0001>
module attributes {stable_mosaic.version = 11 : i64} {
  func.func @_score_kernel(%arg0: i32, %arg1: i32, %arg2: memref<16x64xbf16, #tpu.memory_space<vmem>>, %arg3: memref<64x1024xbf16, #tpu.memory_space<vmem>>, %arg4: memref<16x1024xbf16, #tpu.memory_space<vmem>>) attributes {dimension_semantics = [#tpu.dimension_semantics<parallel>, #tpu.dimension_semantics<parallel>], iteration_bounds = array<i64: 1, 1>, scalar_prefetch = 0 : i64, scratch_operands = 0 : i64, tpu.core_type = #tpu.core_type<tc>, window_params = [{transform_indices = @transform_0, window_bounds = array<i64: 16, 64>}, {transform_indices = @transform_1, window_bounds = array<i64: 64, 1024>}, {transform_indices = @transform_2, window_bounds = array<i64: 16, 1024>}]} {
    %c0 = arith.constant 0 : index
    %c0_0 = arith.constant 0 : index
    %0 = vector.load %arg2[%c0, %c0_0] : memref<16x64xbf16, #tpu.memory_space<vmem>>, vector<16x64xbf16>
    %c0_1 = arith.constant 0 : index
    %c0_2 = arith.constant 0 : index
    %1 = vector.load %arg3[%c0_1, %c0_2] : memref<64x1024xbf16, #tpu.memory_space<vmem>>, vector<64x1024xbf16>
    %cst = arith.constant dense<0.000000e+00> : vector<16x1024xf32>
    %2 = tpu.matmul %0, %1, %cst {dimension_numbers = #tpu.dot_dimension_numbers<[1], [0], [0], [1], [0, 0, 1, 1], [], []>} : vector<16x64xbf16>, vector<64x1024xbf16>, vector<16x1024xf32> -> vector<16x1024xf32>
    %3 = arith.negf %2 : vector<16x1024xf32>
    %4 = math.exp %3 : vector<16x1024xf32>
    %cst_3 = arith.constant 1.000000e+00 : f32
    %5 = vector.broadcast %cst_3 : f32 to vector<16x1024xf32>
    %6 = arith.addf %5, %4 : vector<16x1024xf32>
    %7 = arith.divf %5, %6 : vector<16x1024xf32>
    %8 = arith.truncf %7 : vector<16x1024xf32> to vector<16x1024xbf16>
    %c0_4 = arith.constant 0 : index
    %c0_5 = arith.constant 0 : index
    %9 = vector.load %arg4[%c0_4, %c0_5] : memref<16x1024xbf16, #tpu.memory_space<vmem>>, vector<16x1024xbf16>
    tpu.vector_store %arg4[%c0_4, %c0_5], %8 {strides = array<i32>} : memref<16x1024xbf16, #tpu.memory_space<vmem>>, vector<16x1024xbf16>,
    return
  }
  func.func @transform_0(%arg0: i32, %arg1: i32) -> (i32, i32) {
    %c0_i32 = arith.constant 0 : i32
    %c0_i32_0 = arith.constant 0 : i32
    return %arg1, %c0_i32 : i32, i32
  }
  func.func @transform_1(%arg0: i32, %arg1: i32) -> (i32, i32) {
    %c0_i32 = arith.constant 0 : i32
    %c0_i32_0 = arith.constant 0 : i32
    return %c0_i32, %arg0 : i32, i32
  }
  func.func @transform_2(%arg0: i32, %arg1: i32) -> (i32, i32) {
    %c0_i32 = arith.constant 0 : i32
    return %arg1, %arg0 : i32, i32
  }
}

</mosaic_0001>

<llo_original>
// kernel: tpu_custom_call.1
$region0: #{tpu_custom_call.1}
  #allocation0 [shape = 'u32[]', space=smem, size = 0x4, offset = 0x4, fixed_abs, tag = 'smem constant byte address 0x4 - core index']
  #allocation1 [shape = 'u32[144,128]{1,0:T(1,128)}', space=vmem, size = 0x12000, scoped, tag = 'internal scratch']
  %s0 = inlined_call_operand.hbm [shape: bf16[16,64], index: 0, kind: input, shape index: {}]
  %s1 = inlined_call_operand.hbm [shape: bf16[64,1024], index: 1, kind: input, shape index: {}]
  %s2 = inlined_call_operand.hbm [shape: bf16[16,1024], index: 2, kind: output, shape index: {}]
  %s3 = sld [smem:[#allocation0]]
  $region26: #{tpu_custom_call.1} parent=0
    _
  %s5 = ssub.s32 1, %s3
  %s6 = scalar_select 0, %s5, %s3
  $region1: #{tpu_custom_call.1} parent=0
    #allocation2 [shape = 'u8[4096]{0}', space=vmem, size = 0x1000, scoped, tag = 'input window, operand 0, single buffered']
    #allocation3 [shape = 's32[1]{0}', space=sflag, size = 0x4, scoped, tag = 'scoped memory for tpu_custom_call.1']
    #allocation4 [shape = 's32[1]{0}', space=sflag, size = 0x4, scoped, tag = 'scoped memory for tpu_custom_call.1']
    #allocation5 [shape = 'u8[131072]{0}', space=vmem, size = 0x20000, scoped, tag = 'input window, operand 1, single buffered']
    #allocation6 [shape = 's32[1]{0}', space=sflag, size = 0x4, scoped, tag = 'scoped memory for tpu_custom_call.1']
    #allocation7 [shape = 'u8[32768]{0}', space=vmem, size = 0x8000, scoped, tag = 'output window, operand 0, single buffered']
    %7 = vsyncpa [#allocation3], 0
    %8 = vsyncpa [#allocation6], 0
    %9 = vsyncpa [#allocation4], 0
    // Predicated region
    $region2: #{tpu_custom_call.1} parent=1 // pred_check
      _
    $region3: #{tpu_custom_call.1} parent=1 // pred_check_branch
      %11 = sbr.rel (0) target = $region5
    $region4: #{tpu_custom_call.1} parent=1 // pred_region
      %s13 = ssub.s32 128, 128
      %14 = vsyncadd [#allocation3], %s13
      %s15 = sshll.u32 [#allocation2], 4
      %s16 = int_to_ptr.vmem [resolvable:$true] %s15
      %21 = dma.hbm_to_vmem [thread:$0]  %s0, 128, %s16, [#allocation3], 64, 64, 4
    $region5: #{tpu_custom_call.1} parent=1 // pred_fallthru
      _
    // Predicated region
    $region6: #{tpu_custom_call.1} parent=1 // pred_check
      _
    $region7: #{tpu_custom_call.1} parent=1 // pred_check_branch
      %23 = sbr.rel (0) target = $region9
    $region8: #{tpu_custom_call.1} parent=1 // pred_region
      %s25 = ssub.s32 4096, 4096
      %26 = vsyncadd [#allocation6], %s25
      %s27 = sshll.u32 [#allocation5], 4
      %s28 = int_to_ptr.vmem [resolvable:$true] %s27
      %33 = dma.hbm_to_vmem [thread:$0]  %s1, 4096, %s28, [#allocation6], 512, 512, 32
    $region9: #{tpu_custom_call.1} parent=1 // pred_fallthru
      _
    // Predicated region
    $region10: #{tpu_custom_call.1} parent=1 // pred_check
      _
    $region11: #{tpu_custom_call.1} parent=1 // pred_check_branch
      %35 = sbr.rel (0) target = $region13
    $region12: #{tpu_custom_call.1} parent=1 // pred_region
      %36 = dma.done [#allocation3], 128
    $region13: #{tpu_custom_call.1} parent=1 // pred_fallthru
      _
    // Predicated region
    $region14: #{tpu_custom_call.1} parent=1 // pred_check
      _
    $region15: #{tpu_custom_call.1} parent=1 // pred_check_branch
      %38 = sbr.rel (0) target = $region17
    $region16: #{tpu_custom_call.1} parent=1 // pred_region
      %39 = dma.done [#allocation6], 4096
    $region17: #{tpu_custom_call.1} parent=1 // pred_fallthru
      _
    %v41 = vld [vmem:[#allocation2] sm:$0xf]
    %v42 = vld [vmem:[#allocation2 + $0x4] sm:$0xf]
    %v43 = vld [vmem:[#allocation5] sm:$0xff]
    %v44 = vld [vmem:[#allocation5 + $0x8] sm:$0xff]
    %v45 = vld [vmem:[#allocation5 + $0x10] sm:$0xff]
    %v46 = vld [vmem:[#allocation5 + $0x18] sm:$0xff]
    %v47 = vld [vmem:[#allocation5 + $0x20] sm:$0xff]
    %v48 = vld [vmem:[#allocation5 + $0x28] sm:$0xff]
    %v49 = vld [vmem:[#allocation5 + $0x30] sm:$0xff]
    %v50 = vld [vmem:[#allocation5 + $0x38] sm:$0xff]
    %v51 = vld [vmem:[#allocation5 + $0x40] sm:$0xff]
    %v52 = vld [vmem:[#allocation5 + $0x48] sm:$0xff]
    %v53 = vld [vmem:[#allocation5 + $0x50] sm:$0xff]
    %v54 = vld [vmem:[#allocation5 + $0x58] sm:$0xff]
    %v55 = vld [vmem:[#allocation5 + $0x60] sm:$0xff]
    %v56 = vld [vmem:[#allocation5 + $0x68] sm:$0xff]
    %v57 = vld [vmem:[#allocation5 + $0x70] sm:$0xff]
    %v58 = vld [vmem:[#allocation5 + $0x78] sm:$0xff]
    %v59 = vld [vmem:[#allocation5 + $0x80] sm:$0xff]
    %v60 = vld [vmem:[#allocation5 + $0x88] sm:$0xff]
    %v61 = vld [vmem:[#allocation5 + $0x90] sm:$0xff]
    %v62 = vld [vmem:[#allocation5 + $0x98] sm:$0xff]
    %v63 = vld [vmem:[#allocation5 + $0xa0] sm:$0xff]
    %v64 = vld [vmem:[#allocation5 + $0xa8] sm:$0xff]
    %v65 = vld [vmem:[#allocation5 + $0xb0] sm:$0xff]
    %v66 = vld [vmem:[#allocation5 + $0xb8] sm:$0xff]
    %v67 = vld [vmem:[#allocation5 + $0xc0] sm:$0xff]
    %v68 = vld [vmem:[#allocation5 + $0xc8] sm:$0xff]
    %v69 = vld [vmem:[#allocation5 + $0xd0] sm:$0xff]
    %v70 = vld [vmem:[#allocation5 + $0xd8] sm:$0xff]
    %v71 = vld [vmem:[#allocation5 + $0xe0] sm:$0xff]
    %v72 = vld [vmem:[#allocation5 + $0xe8] sm:$0xff]
    %v73 = vld [vmem:[#allocation5 + $0xf0] sm:$0xff]
    %v74 = vld [vmem:[#allocation5 + $0xf8] sm:$0xff]
    %v77 = vunpack.c.l.b16 %v41
    %v78 = vunpack.c.l.b16 %v42
    %v79 = vpack.c.b16 %v78, %v77
    %v112 = vunpack.c.l.b16 %v43
    %v113 = vunpack.c.h.b16 %v43
    %v114 = vunpack.c.l.b16 %v44
    %v115 = vunpack.c.h.b16 %v44
    %v116 = vunpack.c.l.b16 %v45
    %v117 = vunpack.c.h.b16 %v45
    %v118 = vunpack.c.l.b16 %v46
    %v119 = vunpack.c.h.b16 %v46
    %v120 = vunpack.c.l.b16 %v47
    %v121 = vunpack.c.h.b16 %v47
    %v122 = vunpack.c.l.b16 %v48
    %v123 = vunpack.c.h.b16 %v48
    %v124 = vunpack.c.l.b16 %v49
    %v125 = vunpack.c.h.b16 %v49
    %v126 = vunpack.c.l.b16 %v50
    %v127 = vunpack.c.h.b16 %v50
    %v128 = vunpack.c.l.b16 %v51
    %v129 = vunpack.c.h.b16 %v51
    %v130 = vunpack.c.l.b16 %v52
    %v131 = vunpack.c.h.b16 %v52
    %v132 = vunpack.c.l.b16 %v53
    %v133 = vunpack.c.h.b16 %v53
    %v134 = vunpack.c.l.b16 %v54
    %v135 = vunpack.c.h.b16 %v54
    %v136 = vunpack.c.l.b16 %v55
    %v137 = vunpack.c.h.b16 %v55
    %v138 = vunpack.c.l.b16 %v56
    %v139 = vunpack.c.h.b16 %v56
    %v140 = vunpack.c.l.b16 %v57
    %v141 = vunpack.c.h.b16 %v57
    %v142 = vunpack.c.l.b16 %v58
    %v143 = vunpack.c.h.b16 %v58
    %v144 = vunpack.c.l.b16 %v59
    %v145 = vunpack.c.h.b16 %v59
    %v146 = vunpack.c.l.b16 %v60
    %v147 = vunpack.c.h.b16 %v60
    %v148 = vunpack.c.l.b16 %v61
    %v149 = vunpack.c.h.b16 %v61
    %v150 = vunpack.c.l.b16 %v62
    %v151 = vunpack.c.h.b16 %v62
    %v152 = vunpack.c.l.b16 %v63
    %v153 = vunpack.c.h.b16 %v63
    %v154 = vunpack.c.l.b16 %v64
    %v155 = vunpack.c.h.b16 %v64
    %v156 = vunpack.c.l.b16 %v65
    %v157 = vunpack.c.h.b16 %v65
    %v158 = vunpack.c.l.b16 %v66
    %v159 = vunpack.c.h.b16 %v66
    %v160 = vunpack.c.l.b16 %v67
    %v161 = vunpack.c.h.b16 %v67
    %v162 = vunpack.c.l.b16 %v68
    %v163 = vunpack.c.h.b16 %v68
    %v164 = vunpack.c.l.b16 %v69
    %v165 = vunpack.c.h.b16 %v69
    %v166 = vunpack.c.l.b16 %v70
    %v167 = vunpack.c.h.b16 %v70
    %v168 = vunpack.c.l.b16 %v71
    %v169 = vunpack.c.h.b16 %v71
    %v170 = vunpack.c.l.b16 %v72
    %v171 = vunpack.c.h.b16 %v72
    %v172 = vunpack.c.l.b16 %v73
    %v173 = vunpack.c.h.b16 %v73
    %v174 = vunpack.c.l.b16 %v74
    %v175 = vunpack.c.h.b16 %v74
    %v176 = vpack.c.b16 %v120, %v112
    %v177 = vpack.c.b16 %v121, %v113
    %v178 = vpack.c.b16 %v122, %v114
    %v179 = vpack.c.b16 %v123, %v115
    %v180 = vpack.c.b16 %v124, %v116
    %v181 = vpack.c.b16 %v125, %v117
    %v182 = vpack.c.b16 %v126, %v118
    %v183 = vpack.c.b16 %v127, %v119
    %v184 = vpack.c.b16 %v136, %v128
    %v185 = vpack.c.b16 %v137, %v129
    %v186 = vpack.c.b16 %v138, %v130
    %v187 = vpack.c.b16 %v139, %v131
    %v188 = vpack.c.b16 %v140, %v132
    %v189 = vpack.c.b16 %v141, %v133
    %v190 = vpack.c.b16 %v142, %v134
    %v191 = vpack.c.b16 %v143, %v135
    %v192 = vpack.c.b16 %v152, %v144
    %v193 = vpack.c.b16 %v153, %v145
    %v194 = vpack.c.b16 %v154, %v146
    %v195 = vpack.c.b16 %v155, %v147
    %v196 = vpack.c.b16 %v156, %v148
    %v197 = vpack.c.b16 %v157, %v149
    %v198 = vpack.c.b16 %v158, %v150
    %v199 = vpack.c.b16 %v159, %v151
    %v200 = vpack.c.b16 %v168, %v160
    %v201 = vpack.c.b16 %v169, %v161
    %v202 = vpack.c.b16 %v170, %v162
    %v203 = vpack.c.b16 %v171, %v163
    %v204 = vpack.c.b16 %v172, %v164
    %v205 = vpack.c.b16 %v173, %v165
    %v206 = vpack.c.b16 %v174, %v166
    %v207 = vpack.c.b16 %v175, %v167
    %vm240 = vcmask 523264
    %v242 = vsel %vm240, %v79, 0
    %244 = vmatprep.subr.bf16.mxu0 0
    %245 = vmatpush1.bf16.msra.mxu0 0
    %246 = vmatprep.subr.bf16.mxu0 0
    %247 = vmatpush1.bf16.msra.mxu0 0
    %248 = vmatprep.subr.bf16.mxu0 0
    %249 = vmatpush1.bf16.msra.mxu0 0
    %250 = vmatprep.subr.bf16.mxu0 0
    %251 = vmatpush1.bf16.msra.mxu0 0
    %252 = vmatprep.subr.bf16.mxu0 %v201
    %253 = vmatpush1.bf16.msra.mxu0 %v200
    %254 = vmatprep.subr.bf16.mxu0 %v193
    %255 = vmatpush1.bf16.msra.mxu0 %v192
    %256 = vmatprep.subr.bf16.mxu0 %v185
    %257 = vmatpush1.bf16.msra.mxu0 %v184
    %258 = vmatprep.subr.bf16.mxu0 %v177
    %259 = vmatpush1.bf16.msra.mxu0 %v176
    %260 = vmatprep.subr.bf16.mxu0 0
    %261 = vmatpush2.bf16.msra.mxu0 0
    %262 = vmatprep.subr.bf16.mxu0 0
    %263 = vmatpush2.bf16.msra.mxu0 0
    %264 = vmatprep.subr.bf16.mxu0 0
    %265 = vmatpush2.bf16.msra.mxu0 0
    %266 = vmatprep.subr.bf16.mxu0 0
    %267 = vmatpush2.bf16.msra.mxu0 0
    %268 = vmatprep.subr.bf16.mxu0 0
    %269 = vmatpush2.bf16.msra.mxu0 0
    %270 = vmatprep.subr.bf16.mxu0 0
    %271 = vmatpush2.bf16.msra.mxu0 0
    %272 = vmatprep.subr.bf16.mxu0 0
    %273 = vmatpush2.bf16.msra.mxu0 0
    %274 = vmatprep.subr.bf16.mxu0 0
    %275 = vmatpush2.bf16.msra.mxu0 0
    %276 = vmatprep.mubr.bf16.mxu0 0
    %277 = vmatmul.mubr.bf16.gmra.mxu0 %v242
    %v278 = vpop.f32.mrf.mxu0
    %v279 = vadd.f32 0.0, %v278
    %v280 = vpop.f32.mrf.mxu0
    %v281 = vadd.f32 0.0, %v280
    %v282 = vpop.f32.mrf.mxu0
    %v283 = vadd.f32 0.0, %v282
    %v284 = vpop.f32.mrf.mxu0
    %v285 = vadd.f32 0.0, %v284
    %286 = vdwg.mxu0
    %287 = vmatprep.subr.bf16.mxu0 0
    %288 = vmatpush1.bf16.msra.mxu0 0
    %289 = vmatprep.subr.bf16.mxu0 0
    %290 = vmatpush1.bf16.msra.mxu0 0
    %291 = vmatprep.subr.bf16.mxu0 0
    %292 = vmatpush1.bf16.msra.mxu0 0
    %293 = vmatprep.subr.bf16.mxu0 0
    %294 = vmatpush1.bf16.msra.mxu0 0
    %295 = vmatprep.subr.bf16.mxu0 %v203
    %296 = vmatpush1.bf16.msra.mxu0 %v202
    %297 = vmatprep.subr.bf16.mxu0 %v195
    %298 = vmatpush1.bf16.msra.mxu0 %v194
    %299 = vmatprep.subr.bf16.mxu0 %v187
    %300 = vmatpush1.bf16.msra.mxu0 %v186
    %301 = vmatprep.subr.bf16.mxu0 %v179
    %302 = vmatpush1.bf16.msra.mxu0 %v178
    %303 = vmatprep.subr.bf16.mxu0 0
    %304 = vmatpush2.bf16.msra.mxu0 0
    %305 = vmatprep.subr.bf16.mxu0 0
    %306 = vmatpush2.bf16.msra.mxu0 0
    %307 = vmatprep.subr.bf16.mxu0 0
    %308 = vmatpush2.bf16.msra.mxu0 0
    %309 = vmatprep.subr.bf16.mxu0 0
    %310 = vmatpush2.bf16.msra.mxu0 0
    %311 = vmatprep.subr.bf16.mxu0 0
    %312 = vmatpush2.bf16.msra.mxu0 0
    %313 = vmatprep.subr.bf16.mxu0 0
    %314 = vmatpush2.bf16.msra.mxu0 0
    %315 = vmatprep.subr.bf16.mxu0 0
    %316 = vmatpush2.bf16.msra.mxu0 0
    %317 = vmatprep.subr.bf16.mxu0 0
    %318 = vmatpush2.bf16.msra.mxu0 0
    %319 = vmatprep.mubr.bf16.mxu0 0
    %320 = vmatmul.mubr.bf16.gmra.mxu0 %v242
    %v321 = vpop.f32.mrf.mxu0
    %v322 = vadd.f32 0.0, %v321
    %v323 = vpop.f32.mrf.mxu0
    %v324 = vadd.f32 0.0, %v323
    %v325 = vpop.f32.mrf.mxu0
    %v326 = vadd.f32 0.0, %v325
    %v327 = vpop.f32.mrf.mxu0
    %v328 = vadd.f32 0.0, %v327
    %329 = vdwg.mxu0
    %330 = vmatprep.subr.bf16.mxu0 0
    %331 = vmatpush1.bf16.msra.mxu0 0
    %332 = vmatprep.subr.bf16.mxu0 0
    %333 = vmatpush1.bf16.msra.mxu0 0
    %334 = vmatprep.subr.bf16.mxu0 0
    %335 = vmatpush1.bf16.msra.mxu0 0
    %336 = vmatprep.subr.bf16.mxu0 0
    %337 = vmatpush1.bf16.msra.mxu0 0
    %338 = vmatprep.subr.bf16.mxu0 %v205
    %339 = vmatpush1.bf16.msra.mxu0 %v204
    %340 = vmatprep.subr.bf16.mxu0 %v197
    %341 = vmatpush1.bf16.msra.mxu0 %v196
    %342 = vmatprep.subr.bf16.mxu0 %v189
    %343 = vmatpush1.bf16.msra.mxu0 %v188
    %344 = vmatprep.subr.bf16.mxu0 %v181
    %345 = vmatpush1.bf16.msra.mxu0 %v180
    %346 = vmatprep.subr.bf16.mxu0 0
    %347 = vmatpush2.bf16.msra.mxu0 0
    %348 = vmatprep.subr.bf16.mxu0 0
    %349 = vmatpush2.bf16.msra.mxu0 0
    %350 = vmatprep.subr.bf16.mxu0 0
    %351 = vmatpush2.bf16.msra.mxu0 0
    %352 = vmatprep.subr.bf16.mxu0 0
    %353 = vmatpush2.bf16.msra.mxu0 0
    %354 = vmatprep.subr.bf16.mxu0 0
    %355 = vmatpush2.bf16.msra.mxu0 0
    %356 = vmatprep.subr.bf16.mxu0 0
    %357 = vmatpush2.bf16.msra.mxu0 0
    %358 = vmatprep.subr.bf16.mxu0 0
    %359 = vmatpush2.bf16.msra.mxu0 0
    %360 = vmatprep.subr.bf16.mxu0 0
    %361 = vmatpush2.bf16.msra.mxu0 0
    %362 = vmatprep.mubr.bf16.mxu0 0
    %363 = vmatmul.mubr.bf16.gmra.mxu0 %v242
    %v364 = vpop.f32.mrf.mxu0
    %v365 = vadd.f32 0.0, %v364
    %v366 = vpop.f32.mrf.mxu0
    %v367 = vadd.f32 0.0, %v366
    %v368 = vpop.f32.mrf.mxu0
    %v369 = vadd.f32 0.0, %v368
    %v370 = vpop.f32.mrf.mxu0
    %v371 = vadd.f32 0.0, %v370
    %372 = vdwg.mxu0
    %373 = vmatprep.subr.bf16.mxu0 0
    %374 = vmatpush1.bf16.msra.mxu0 0
    %375 = vmatprep.subr.bf16.mxu0 0
    %376 = vmatpush1.bf16.msra.mxu0 0
    %377 = vmatprep.subr.bf16.mxu0 0
    %378 = vmatpush1.bf16.msra.mxu0 0
    %379 = vmatprep.subr.bf16.mxu0 0
    %380 = vmatpush1.bf16.msra.mxu0 0
    %381 = vmatprep.subr.bf16.mxu0 %v207
    %382 = vmatpush1.bf16.msra.mxu0 %v206
    %383 = vmatprep.subr.bf16.mxu0 %v199
    %384 = vmatpush1.bf16.msra.mxu0 %v198
    %385 = vmatprep.subr.bf16.mxu0 %v191
    %386 = vmatpush1.bf16.msra.mxu0 %v190
    %387 = vmatprep.subr.bf16.mxu0 %v183
    %388 = vmatpush1.bf16.msra.mxu0 %v182
    %389 = vmatprep.subr.bf16.mxu0 0
    %390 = vmatpush2.bf16.msra.mxu0 0
    %391 = vmatprep.subr.bf16.mxu0 0
    %392 = vmatpush2.bf16.msra.mxu0 0
    %393 = vmatprep.subr.bf16.mxu0 0
    %394 = vmatpush2.bf16.msra.mxu0 0
    %395 = vmatprep.subr.bf16.mxu0 0
    %396 = vmatpush2.bf16.msra.mxu0 0
    %397 = vmatprep.subr.bf16.mxu0 0
    %398 = vmatpush2.bf16.msra.mxu0 0
    %399 = vmatprep.subr.bf16.mxu0 0
    %400 = vmatpush2.bf16.msra.mxu0 0
    %401 = vmatprep.subr.bf16.mxu0 0
    %402 = vmatpush2.bf16.msra.mxu0 0
    %403 = vmatprep.subr.bf16.mxu0 0
    %404 = vmatpush2.bf16.msra.mxu0 0
    %405 = vmatprep.mubr.bf16.mxu0 0
    %406 = vmatmul.mubr.bf16.gmra.mxu0 %v242
    %v407 = vpop.f32.mrf.mxu0
    %v408 = vadd.f32 0.0, %v407
    %v409 = vpop.f32.mrf.mxu0
    %v410 = vadd.f32 0.0, %v409
    %v411 = vpop.f32.mrf.mxu0
    %v412 = vadd.f32 0.0, %v411
    %v413 = vpop.f32.mrf.mxu0
    %v414 = vadd.f32 0.0, %v413
    %415 = vdwg.mxu0
    %v416 = vxor.u32 %v279, 2147483648
    %v417 = vxor.u32 %v281, 2147483648
    %v418 = vxor.u32 %v322, 2147483648
    %v419 = vxor.u32 %v324, 2147483648
    %v420 = vxor.u32 %v365, 2147483648
    %v421 = vxor.u32 %v367, 2147483648
    %v422 = vxor.u32 %v408, 2147483648
    %v423 = vxor.u32 %v410, 2147483648
    %v424 = vxor.u32 %v283, 2147483648
    %v425 = vxor.u32 %v285, 2147483648
    %v426 = vxor.u32 %v326, 2147483648
    %v427 = vxor.u32 %v328, 2147483648
    %v428 = vxor.u32 %v369, 2147483648
    %v429 = vxor.u32 %v371, 2147483648
    %v430 = vxor.u32 %v412, 2147483648
    %v431 = vxor.u32 %v414, 2147483648
    %v432 = vmul.f32 %v416, 1.442695
    %v433 = vpow.pop %v432
    %v434 = vmul.f32 %v417, 1.442695
    %v435 = vpow.pop %v434
    %v436 = vmul.f32 %v418, 1.442695
    %v437 = vpow.pop %v436
    %v438 = vmul.f32 %v419, 1.442695
    %v439 = vpow.pop %v438
    %v440 = vmul.f32 %v420, 1.442695
    %v441 = vpow.pop %v440
    %v442 = vmul.f32 %v421, 1.442695
    %v443 = vpow.pop %v442
    %v444 = vmul.f32 %v422, 1.442695
    %v445 = vpow.pop %v444
    %v446 = vmul.f32 %v423, 1.442695
    %v447 = vpow.pop %v446
    %v448 = vmul.f32 %v424, 1.442695
    %v449 = vpow.pop %v448
    %v450 = vmul.f32 %v425, 1.442695
    %v451 = vpow.pop %v450
    %v452 = vmul.f32 %v426, 1.442695
    %v453 = vpow.pop %v452
    %v454 = vmul.f32 %v427, 1.442695
    %v455 = vpow.pop %v454
    %v456 = vmul.f32 %v428, 1.442695
    %v457 = vpow.pop %v456
    %v458 = vmul.f32 %v429, 1.442695
    %v459 = vpow.pop %v458
    %v460 = vmul.f32 %v430, 1.442695
    %v461 = vpow.pop %v460
    %v462 = vmul.f32 %v431, 1.442695
    %v463 = vpow.pop %v462
    %v464 = vadd.f32 %v433, 1.0
    %v465 = vadd.f32 %v435, 1.0
    %v466 = vadd.f32 %v437, 1.0
    %v467 = vadd.f32 %v439, 1.0
    %v468 = vadd.f32 %v441, 1.0
    %v469 = vadd.f32 %v443, 1.0
    %v470 = vadd.f32 %v445, 1.0
    %v471 = vadd.f32 %v447, 1.0
    %v472 = vadd.f32 %v449, 1.0
    %v473 = vadd.f32 %v451, 1.0
    %v474 = vadd.f32 %v453, 1.0
    %v475 = vadd.f32 %v455, 1.0
    %v476 = vadd.f32 %v457, 1.0
    %v477 = vadd.f32 %v459, 1.0
    %v478 = vadd.f32 %v461, 1.0
    %v479 = vadd.f32 %v463, 1.0
    %v480 = vrcp.pop %v464
    %v481 = vmul.f32 1.0, %v480
    %v482 = vrcp.pop %v465
    %v483 = vmul.f32 1.0, %v482
    %v484 = vrcp.pop %v466
    %v485 = vmul.f32 1.0, %v484
    %v486 = vrcp.pop %v467
    %v487 = vmul.f32 1.0, %v486
    %v488 = vrcp.pop %v468
    %v489 = vmul.f32 1.0, %v488
    %v490 = vrcp.pop %v469
    %v491 = vmul.f32 1.0, %v490
    %v492 = vrcp.pop %v470
    %v493 = vmul.f32 1.0, %v492
    %v494 = vrcp.pop %v471
    %v495 = vmul.f32 1.0, %v494
    %v496 = vrcp.pop %v472
    %v497 = vmul.f32 1.0, %v496
    %v498 = vrcp.pop %v473
    %v499 = vmul.f32 1.0, %v498
    %v500 = vrcp.pop %v474
    %v501 = vmul.f32 1.0, %v500
    %v502 = vrcp.pop %v475
    %v503 = vmul.f32 1.0, %v502
    %v504 = vrcp.pop %v476
    %v505 = vmul.f32 1.0, %v504
    %v506 = vrcp.pop %v477
    %v507 = vmul.f32 1.0, %v506
    %v508 = vrcp.pop %v478
    %v509 = vmul.f32 1.0, %v508
    %v510 = vrcp.pop %v479
    %v511 = vmul.f32 1.0, %v510
    %v512 = vpack.c.bf16 %v497, %v481
    %v513 = vpack.c.bf16 %v499, %v483
    %v514 = vpack.c.bf16 %v501, %v485
    %v515 = vpack.c.bf16 %v503, %v487
    %v516 = vpack.c.bf16 %v505, %v489
    %v517 = vpack.c.bf16 %v507, %v491
    %v518 = vpack.c.bf16 %v509, %v493
    %v519 = vpack.c.bf16 %v511, %v495
    %v528 = vunpack.c.l.b16 %v512
    %v529 = vunpack.c.l.b16 %v513
    %v530 = vunpack.c.l.b16 %v514
    %v531 = vunpack.c.l.b16 %v515
    %v532 = vunpack.c.l.b16 %v516
    %v533 = vunpack.c.l.b16 %v517
    %v534 = vunpack.c.l.b16 %v518
    %v535 = vunpack.c.l.b16 %v519
    %v536 = vunpack.c.h.b16 %v512
    %v537 = vunpack.c.h.b16 %v513
    %v538 = vunpack.c.h.b16 %v514
    %v539 = vunpack.c.h.b16 %v515
    %v540 = vunpack.c.h.b16 %v516
    %v541 = vunpack.c.h.b16 %v517
    %v542 = vunpack.c.h.b16 %v518
    %v543 = vunpack.c.h.b16 %v519
    %v544 = vpack.c.b16 %v529, %v528
    %v545 = vpack.c.b16 %v531, %v530
    %v546 = vpack.c.b16 %v533, %v532
    %v547 = vpack.c.b16 %v535, %v534
    %v548 = vpack.c.b16 %v537, %v536
    %v549 = vpack.c.b16 %v539, %v538
    %v550 = vpack.c.b16 %v541, %v540
    %v551 = vpack.c.b16 %v543, %v542
    %560 = vst [vmem:[#allocation7] sm:$0xff] %v544
    %561 = vst [vmem:[#allocation7 + $0x8] sm:$0xff] %v545
    %562 = vst [vmem:[#allocation7 + $0x10] sm:$0xff] %v546
    %563 = vst [vmem:[#allocation7 + $0x18] sm:$0xff] %v547
    %564 = vst [vmem:[#allocation7 + $0x20] sm:$0xff] %v548
    %565 = vst [vmem:[#allocation7 + $0x28] sm:$0xff] %v549
    %566 = vst [vmem:[#allocation7 + $0x30] sm:$0xff] %v550
    %567 = vst [vmem:[#allocation7 + $0x38] sm:$0xff] %v551
    // Predicated region
    $region18: #{tpu_custom_call.1} parent=1 // pred_check
      _
    $region19: #{tpu_custom_call.1} parent=1 // pred_check_branch
      %569 = sbr.rel (0) target = $region21
    $region20: #{tpu_custom_call.1} parent=1 // pred_region
      %s571 = ssub.s32 1024, 1024
      %572 = vsyncadd [#allocation4], %s571
      %s573 = sshll.u32 [#allocation7], 4
      %s574 = int_to_ptr.vmem [resolvable:$true] %s573
      %579 = dma.vmem_to_hbm [thread:$0]  %s574, 1024, %s2, [#allocation4], 512, 512, 32
    $region21: #{tpu_custom_call.1} parent=1 // pred_fallthru
      _
    // Predicated region
    $region22: #{tpu_custom_call.1} parent=1 // pred_check
      _
    $region23: #{tpu_custom_call.1} parent=1 // pred_check_branch
      %581 = sbr.rel (0) target = $region25
    $region24: #{tpu_custom_call.1} parent=1 // pred_region
      %582 = dma.done [#allocation4], 1024
    $region25: #{tpu_custom_call.1} parent=1 // pred_fallthru
      _
    %583 = vsyncpa [#allocation3], 1
    %584 = vsyncpa [#allocation6], 1
    %585 = vsyncpa [#allocation4], 1

</llo_original>
